<compile_context>
chip_gen: v7x
topology: tpu7x:2x2x1
jax: 0.10.0
libtpu: 0.0.40
codegen_flags: <defaults>
</compile_context>

<pallas_src>
import functools
import math
from typing import NamedTuple

import jax
import jax.numpy as jnp
from jax.experimental import pallas as pl
from jax.experimental.pallas import tpu as pltpu

_LANE = 128
_SUBLANE = 8


def _round_up(x, m):
    return ((x + m - 1) // m) * m


@functools.lru_cache(maxsize=1)
def _vmem_cap_bytes():
    """Generation-aware scoped-VMEM cap (leaves headroom for compiler scratch)."""
    capacity = 64 << 20            # conservative fallback = v7x per-TC VMEM
    try:
        capacity = int(pltpu.get_tpu_info().vmem_capacity_bytes)
    except Exception:
        pass
    # ~52 MiB on a 64 MiB chip (v7x), ~108 MiB on 128 MiB chips (v5e / v6e).
    return int(min(capacity * 0.85, capacity - (12 << 20)))


# --------------------------------- kernel ------------------------------------

def _policy_kernel(x_ref, w1_ref, hb_ref, w2_ref, wm_ref, head_ref, out_ref):
    """Fused MLP: (linear+relu) x2, linear+tanh, affine. One batch tile/step."""
    # Matmul inputs in the weight dtype (f32 or bf16); MXU accumulates in f32
    # via preferred_element_type; all elementwise work stays f32.
    x = x_ref[...].astype(w1_ref.dtype)                                # [TB, D_in]

    h1 = jnp.dot(x, w1_ref[...], preferred_element_type=jnp.float32)
    h1 = jnp.maximum(h1 + hb_ref[0:1, :], 0.0)                         # [TB, H] f32

    h2 = jnp.dot(h1.astype(w2_ref.dtype), w2_ref[...],
                 preferred_element_type=jnp.float32)
    h2 = jnp.maximum(h2 + hb_ref[1:2, :], 0.0)                         # [TB, H] f32

    m = jnp.dot(h2.astype(wm_ref.dtype), wm_ref[...],
                preferred_element_type=jnp.float32)                    # [TB, A_pad]
    m = jnp.tanh(m + head_ref[0:1, :]) * head_ref[1:2, :] + head_ref[2:3, :]

    out_ref[...] = m.astype(out_ref.dtype)


# ----------------------------- prepared params -------------------------------

class PreparedPolicy(NamedTuple):
    w1: jax.Array            # [D_in, H]   param_dtype
    hidden_bias: jax.Array   # [2, H]      f32   (b1; b2)
    w2: jax.Array            # [H, H]      param_dtype
    wm: jax.Array            # [H, A_pad]  param_dtype (lane-padded)
    head: jax.Array          # [3, A_pad]  f32   (bm; action_scale; action_bias)
    num_inputs: int
    hidden_dim: int
    num_actions: int


def prepare_policy_params(params, action_scale=1.0, action_bias=0.0,
                          param_dtype=None):
    """One-time (hot-path-free) padding / casting / stacking of parameters."""
    w1, b1, w2, b2, wm, bm = params
    D_in, H = w1.shape
    A = wm.shape[1]
    A_pad = _round_up(A, _LANE)

    if param_dtype is None:
        # Auto: keep f32 weights resident unless they'd eat a big VMEM share.
        f32_weight_bytes = (D_in * H + H * H + H * A_pad) * 4
        param_dtype = (jnp.bfloat16 if f32_weight_bytes > _vmem_cap_bytes() // 4
                       else jnp.float32)
    param_dtype = jnp.dtype(param_dtype)

    # Lane-padded mean head (unmasked full-lane stores in the kernel).
    wm_p = jnp.zeros((H, A_pad), param_dtype).at[:, :A].set(wm.astype(param_dtype))

    bm_row = jnp.zeros((1, A_pad), jnp.float32).at[:, :A].set(
        bm.reshape(1, A).astype(jnp.float32))
    scale_v = jnp.broadcast_to(
        jnp.asarray(action_scale, jnp.float32).reshape(-1), (A,))
    bias_v = jnp.broadcast_to(
        jnp.asarray(action_bias, jnp.float32).reshape(-1), (A,))
    scale_row = jnp.ones((1, A_pad), jnp.float32).at[:, :A].set(scale_v)
    bias_row = jnp.zeros((1, A_pad), jnp.float32).at[:, :A].set(bias_v)
    head = jnp.concatenate([bm_row, scale_row, bias_row], axis=0)       # [3, A_pad]

    hidden_bias = jnp.concatenate(
        [b1.reshape(1, H), b2.reshape(1, H)], axis=0).astype(jnp.float32)

    return PreparedPolicy(w1.astype(param_dtype), hidden_bias,
                          w2.astype(param_dtype), wm_p, head, D_in, H, A)


# --------------------------------- forward -----------------------------------

def _build_policy_call(TB, B_pad, D_in, H, A_pad, vmem_limit,
                       single_buffer_consts):
    const_kw = ({"pipeline_mode": pl.Buffered(1)} if single_buffer_consts else {})
    const2d = lambda i: (0, 0)      # weights / biases: same block every step
    batch2d = lambda i: (i, 0)      # state / output: tiled over batch
    return pl.pallas_call(
        _policy_kernel,
        out_shape=jax.ShapeDtypeStruct((B_pad, A_pad), jnp.float32),
        grid=(B_pad // TB,),
        in_specs=[
            pl.BlockSpec((TB, D_in), batch2d),                  # state
            pl.BlockSpec((D_in, H), const2d, **const_kw),       # W1
            pl.BlockSpec((2, H), const2d, **const_kw),          # b1, b2
            pl.BlockSpec((H, H), const2d, **const_kw),          # W2
            pl.BlockSpec((H, A_pad), const2d, **const_kw),      # Wm (lane-padded)
            pl.BlockSpec((3, A_pad), const2d, **const_kw),      # bm, scale, bias
        ],
        out_specs=pl.BlockSpec((TB, A_pad), batch2d),
        compiler_params=pltpu.CompilerParams(
            # TODO(synk): verify "parallel" really shards the batch grid across
            # both v7x TensorCores; else use a leading pltpu.CORE_PARALLEL axis.
            dimension_semantics=("parallel",),
            vmem_limit_bytes=vmem_limit,
        ),
    )


def deterministic_policy_forward(state, prepared: PreparedPolicy, *,
                                 block_b=512):
    """state: [B, num_inputs] f32 -> mean: [B, num_actions] f32."""
    B, D_in = state.shape
    assert D_in == prepared.num_inputs, "state feature dim mismatch"
    H, A = prepared.hidden_dim, prepared.num_actions
    A_pad = prepared.wm.shape[1]
    p_itemsize = jnp.dtype(prepared.w1.dtype).itemsize
    cast_extra = p_itemsize if prepared.w1.dtype != jnp.float32 else 0
    cap = _vmem_cap_bytes()

    def working_set(tb):
        # Weights/biases: single-buffered (their block index never changes).
        w = ((D_in * H + H * H + H * A_pad) * p_itemsize
             + (2 * H + 3 * A_pad) * 4)
        # State / output tiles: double-buffered by the Pallas pipeline.
        io = 2 * (tb * D_in * 4 + tb * A_pad * 4)
        # In-kernel intermediates: h1/h2 in f32 (+ bf16 matmul casts) and the
        # f32 mean tile before the final store.
        inter = tb * H * (2 * 4 + 2 * cast_extra) + tb * A_pad * 4
        return w + io + inter

    TB = _round_up(min(block_b, _round_up(B, _SUBLANE)), _SUBLANE)
    while TB > _SUBLANE and working_set(TB) > cap:
        TB = _round_up(TB // 2, _SUBLANE)
    # TODO(synk): if even TB=8 overflows (huge hidden_dim on v7x), add a K-tiled
    # grid axis for W2 (grid=(B/TB, H/TK), f32 VMEM accumulator, "arbitrary" K).

    B_pad = _round_up(B, TB)
    if B_pad != B:
        state = jnp.pad(state, ((0, B_pad - B), (0, 0)))

    vmem_limit = int(min(max(working_set(TB) * 1.25 + (2 << 20), 16 << 20), cap))

    args = (state.astype(jnp.float32), prepared.w1, prepared.hidden_bias,
            prepared.w2, prepared.wm, prepared.head)
    try:
        out_padded = _build_policy_call(
            TB, B_pad, D_in, H, A_pad, vmem_limit,
            single_buffer_consts=True)(*args)
    except Exception:
        # Fallback if this jax build rejects pipeline_mode=pl.Buffered(1).
        out_padded = _build_policy_call(
            TB, B_pad, D_in, H, A_pad, vmem_limit,
            single_buffer_consts=False)(*args)

    return out_padded[:B, :A]


# ----------------------------- init / reference ------------------------------

def xavier_uniform(key, fan_in, fan_out, gain=1.0, dtype=jnp.float32):
    """Matches torch.nn.init.xavier_uniform_ (stored as [in, out])."""
    limit = gain * math.sqrt(6.0 / (fan_in + fan_out))
    return jax.random.uniform(key, (fan_in, fan_out), dtype,
                              minval=-limit, maxval=limit)


def init_params(key, num_inputs, num_actions, hidden_dim):
    k1, k2, k3 = jax.random.split(key, 3)
    w1 = xavier_uniform(k1, num_inputs, hidden_dim)
    b1 = jnp.zeros((1, hidden_dim), jnp.float32)    # constant_(bias, 0)
    w2 = xavier_uniform(k2, hidden_dim, hidden_dim)
    b2 = jnp.zeros((1, hidden_dim), jnp.float32)
    wm = xavier_uniform(k3, hidden_dim, num_actions)
    bm = jnp.zeros((1, num_actions), jnp.float32)
    return (w1, b1, w2, b2, wm, bm)


def reference_forward(state, params, action_scale=1.0, action_bias=0.0):
    w1, b1, w2, b2, wm, bm = params
    h1 = jnp.maximum(state @ w1 + b1, 0.0)
    h2 = jnp.maximum(h1 @ w2 + b2, 0.0)
    return (jnp.tanh(h2 @ wm + bm) * jnp.asarray(action_scale)
            + jnp.asarray(action_bias))


if __name__ == "__main__":
    num_inputs, num_actions, hidden_dim = 16, 8, 32
    batch = 8

    key = jax.random.PRNGKey(0)
    k_params, k_state, k_state2 = jax.random.split(key, 3)
    params = init_params(k_params, num_inputs, num_actions, hidden_dim)
    state = jax.random.normal(k_state, (batch, num_inputs), jnp.float32)

    # 1) action_space=None case (scale=1, bias=0); auto param_dtype -> f32 here.
    prepped = prepare_policy_params(params)
    mean = deterministic_policy_forward(state, prepped)
    jax.block_until_ready(mean)
    ref = reference_forward(state, params)
    assert mean.shape == (batch, num_actions)
    assert jnp.allclose(mean, ref, atol=1e-5), "f32 mismatch vs reference"

    # 2) per-action scale/bias + bf16 weights + ragged batch (exercises batch
    #    padding, the lane-padded head and the single-buffered const path).
    batch2 = 5
    state2 = jax.random.normal(k_state2, (batch2, num_inputs), jnp.float32)
    a_scale = jnp.linspace(0.5, 2.0, num_actions, dtype=jnp.float32)
    a_bias = jnp.linspace(-0.3, 0.3, num_actions, dtype=jnp.float32)
    prepped_bf16 = prepare_policy_params(params, a_scale, a_bias,
                                         param_dtype=jnp.bfloat16)
    mean2 = deterministic_policy_forward(state2, prepped_bf16, block_b=256)
    jax.block_until_ready(mean2)
    ref2 = reference_forward(state2, params, a_scale, a_bias)
    assert mean2.shape == (batch2, num_actions)
    assert jnp.allclose(mean2, ref2, atol=3e-2), "bf16 mismatch vs reference"

    print("KERNEL_OK")
</pallas_src>

<mosaic_0001>
module attributes {stable_mosaic.version = 11 : i64} {
  func.func @_policy_kernel(%arg0: i32, %arg1: memref<8x16xf32, #tpu.memory_space<vmem>>, %arg2: memref<16x32xf32, #tpu.memory_space<vmem>>, %arg3: memref<2x32xf32, #tpu.memory_space<vmem>>, %arg4: memref<32x32xf32, #tpu.memory_space<vmem>>, %arg5: memref<32x128xf32, #tpu.memory_space<vmem>>, %arg6: memref<3x128xf32, #tpu.memory_space<vmem>>, %arg7: memref<8x128xf32, #tpu.memory_space<vmem>>) attributes {dimension_semantics = [#tpu.dimension_semantics<parallel>], iteration_bounds = array<i64: 1>, scalar_prefetch = 0 : i64, scratch_operands = 0 : i64, tpu.core_type = #tpu.core_type<tc>, window_params = [{transform_indices = @transform_0, window_bounds = array<i64: 8, 16>}, {pipeline_mode = #tpu.pipeline_mode<synchronous>, transform_indices = @transform_1, window_bounds = array<i64: 16, 32>}, {pipeline_mode = #tpu.pipeline_mode<synchronous>, transform_indices = @transform_2, window_bounds = array<i64: 2, 32>}, {pipeline_mode = #tpu.pipeline_mode<synchronous>, transform_indices = @transform_3, window_bounds = array<i64: 32, 32>}, {pipeline_mode = #tpu.pipeline_mode<synchronous>, transform_indices = @transform_4, window_bounds = array<i64: 32, 128>}, {pipeline_mode = #tpu.pipeline_mode<synchronous>, transform_indices = @transform_5, window_bounds = array<i64: 3, 128>}, {transform_indices = @transform_6, window_bounds = array<i64: 8, 128>}]} {
    %c0 = arith.constant 0 : index
    %c0_0 = arith.constant 0 : index
    %0 = vector.load %arg1[%c0, %c0_0] : memref<8x16xf32, #tpu.memory_space<vmem>>, vector<8x16xf32>
    %c0_1 = arith.constant 0 : index
    %c0_2 = arith.constant 0 : index
    %1 = vector.load %arg2[%c0_1, %c0_2] : memref<16x32xf32, #tpu.memory_space<vmem>>, vector<16x32xf32>
    %cst = arith.constant dense<0.000000e+00> : vector<8x32xf32>
    %2 = tpu.matmul %0, %1, %cst {dimension_numbers = #tpu.dot_dimension_numbers<[1], [0], [0], [1], [0, 0, 1, 1], [], []>} : vector<8x16xf32>, vector<16x32xf32>, vector<8x32xf32> -> vector<8x32xf32>
    %c0_3 = arith.constant 0 : index
    %c0_4 = arith.constant 0 : index
    %3 = vector.load %arg3[%c0_3, %c0_4] : memref<2x32xf32, #tpu.memory_space<vmem>>, vector<1x32xf32>
    %4 = vector.broadcast %3 : vector<1x32xf32> to vector<8x32xf32>
    %5 = arith.addf %2, %4 : vector<8x32xf32>
    %cst_5 = arith.constant 0.000000e+00 : f32
    %6 = vector.broadcast %cst_5 : f32 to vector<8x32xf32>
    %7 = arith.maximumf %5, %6 : vector<8x32xf32>
    %c0_6 = arith.constant 0 : index
    %c0_7 = arith.constant 0 : index
    %8 = vector.load %arg4[%c0_6, %c0_7] : memref<32x32xf32, #tpu.memory_space<vmem>>, vector<32x32xf32>
    %cst_8 = arith.constant dense<0.000000e+00> : vector<8x32xf32>
    %9 = tpu.matmul %7, %8, %cst_8 {dimension_numbers = #tpu.dot_dimension_numbers<[1], [0], [0], [1], [0, 0, 1, 1], [], []>} : vector<8x32xf32>, vector<32x32xf32>, vector<8x32xf32> -> vector<8x32xf32>
    %c1 = arith.constant 1 : index
    %c0_9 = arith.constant 0 : index
    %10 = vector.load %arg3[%c1, %c0_9] : memref<2x32xf32, #tpu.memory_space<vmem>>, vector<1x32xf32>
    %11 = vector.broadcast %10 : vector<1x32xf32> to vector<8x32xf32>
    %12 = arith.addf %9, %11 : vector<8x32xf32>
    %cst_10 = arith.constant 0.000000e+00 : f32
    %13 = vector.broadcast %cst_10 : f32 to vector<8x32xf32>
    %14 = arith.maximumf %12, %13 : vector<8x32xf32>
    %c0_11 = arith.constant 0 : index
    %c0_12 = arith.constant 0 : index
    %15 = vector.load %arg5[%c0_11, %c0_12] : memref<32x128xf32, #tpu.memory_space<vmem>>, vector<32x128xf32>
    %cst_13 = arith.constant dense<0.000000e+00> : vector<8x128xf32>
    %16 = tpu.matmul %14, %15, %cst_13 {dimension_numbers = #tpu.dot_dimension_numbers<[1], [0], [0], [1], [0, 0, 1, 1], [], []>} : vector<8x32xf32>, vector<32x128xf32>, vector<8x128xf32> -> vector<8x128xf32>
    %c0_14 = arith.constant 0 : index
    %c0_15 = arith.constant 0 : index
    %17 = vector.load %arg6[%c0_14, %c0_15] : memref<3x128xf32, #tpu.memory_space<vmem>>, vector<1x128xf32>
    %18 = vector.broadcast %17 : vector<1x128xf32> to vector<8x128xf32>
    %19 = arith.addf %16, %18 : vector<8x128xf32>
    %20 = math.tanh %19 : vector<8x128xf32>
    %c1_16 = arith.constant 1 : index
    %c0_17 = arith.constant 0 : index
    %21 = vector.load %arg6[%c1_16, %c0_17] : memref<3x128xf32, #tpu.memory_space<vmem>>, vector<1x128xf32>
    %22 = vector.broadcast %21 : vector<1x128xf32> to vector<8x128xf32>
    %23 = arith.mulf %20, %22 : vector<8x128xf32>
    %c2 = arith.constant 2 : index
    %c0_18 = arith.constant 0 : index
    %24 = vector.load %arg6[%c2, %c0_18] : memref<3x128xf32, #tpu.memory_space<vmem>>, vector<1x128xf32>
    %25 = vector.broadcast %24 : vector<1x128xf32> to vector<8x128xf32>
    %26 = arith.addf %23, %25 : vector<8x128xf32>
    %c0_19 = arith.constant 0 : index
    %c0_20 = arith.constant 0 : index
    %27 = vector.load %arg7[%c0_19, %c0_20] : memref<8x128xf32, #tpu.memory_space<vmem>>, vector<8x128xf32>
    tpu.vector_store %arg7[%c0_19, %c0_20], %26 {strides = array<i32>} : memref<8x128xf32, #tpu.memory_space<vmem>>, vector<8x128xf32>,
    return
  }
  func.func @transform_0(%arg0: i32) -> (i32, i32) {
    %c0_i32 = arith.constant 0 : i32
    %c0_i32_0 = arith.constant 0 : i32
    return %arg0, %c0_i32 : i32, i32
  }
  func.func @transform_1(%arg0: i32) -> (i32, i32) {
    %c0_i32 = arith.constant 0 : i32
    %c0_i32_0 = arith.constant 0 : i32
    %c0_i32_1 = arith.constant 0 : i32
    return %c0_i32, %c0_i32_0 : i32, i32
  }
  func.func @transform_2(%arg0: i32) -> (i32, i32) {
    %c0_i32 = arith.constant 0 : i32
    %c0_i32_0 = arith.constant 0 : i32
    %c0_i32_1 = arith.constant 0 : i32
    return %c0_i32, %c0_i32_0 : i32, i32
  }
  func.func @transform_3(%arg0: i32) -> (i32, i32) {
    %c0_i32 = arith.constant 0 : i32
    %c0_i32_0 = arith.constant 0 : i32
    %c0_i32_1 = arith.constant 0 : i32
    return %c0_i32, %c0_i32_0 : i32, i32
  }
  func.func @transform_4(%arg0: i32) -> (i32, i32) {
    %c0_i32 = arith.constant 0 : i32
    %c0_i32_0 = arith.constant 0 : i32
    %c0_i32_1 = arith.constant 0 : i32
    return %c0_i32, %c0_i32_0 : i32, i32
  }
  func.func @transform_5(%arg0: i32) -> (i32, i32) {
    %c0_i32 = arith.constant 0 : i32
    %c0_i32_0 = arith.constant 0 : i32
    %c0_i32_1 = arith.constant 0 : i32
    return %c0_i32, %c0_i32_0 : i32, i32
  }
  func.func @transform_6(%arg0: i32) -> (i32, i32) {
    %c0_i32 = arith.constant 0 : i32
    %c0_i32_0 = arith.constant 0 : i32
    return %arg0, %c0_i32 : i32, i32
  }
}

module attributes {stable_mosaic.version = 11 : i64} {
  func.func @_policy_kernel(%arg0: i32, %arg1: memref<8x16xf32, #tpu.memory_space<vmem>>, %arg2: memref<16x32xf32, #tpu.memory_space<vmem>>, %arg3: memref<2x32xf32, #tpu.memory_space<vmem>>, %arg4: memref<32x32xf32, #tpu.memory_space<vmem>>, %arg5: memref<32x128xf32, #tpu.memory_space<vmem>>, %arg6: memref<3x128xf32, #tpu.memory_space<vmem>>, %arg7: memref<8x128xf32, #tpu.memory_space<vmem>>) attributes {dimension_semantics = [#tpu.dimension_semantics<parallel>], iteration_bounds = array<i64: 1>, scalar_prefetch = 0 : i64, scratch_operands = 0 : i64, tpu.core_type = #tpu.core_type<tc>, window_params = [{transform_indices = @transform_0, window_bounds = array<i64: 8, 16>}, {pipeline_mode = #tpu.pipeline_mode<synchronous>, transform_indices = @transform_1, window_bounds = array<i64: 16, 32>}, {pipeline_mode = #tpu.pipeline_mode<synchronous>, transform_indices = @transform_2, window_bounds = array<i64: 2, 32>}, {pipeline_mode = #tpu.pipeline_mode<synchronous>, transform_indices = @transform_3, window_bounds = array<i64: 32, 32>}, {pipeline_mode = #tpu.pipeline_mode<synchronous>, transform_indices = @transform_4, window_bounds = array<i64: 32, 128>}, {pipeline_mode = #tpu.pipeline_mode<synchronous>, transform_indices = @transform_5, window_bounds = array<i64: 3, 128>}, {transform_indices = @transform_6, window_bounds = array<i64: 8, 128>}]} {
    %c0 = arith.constant 0 : index
    %c0_0 = arith.constant 0 : index
    %0 = vector.load %arg1[%c0, %c0_0] : memref<8x16xf32, #tpu.memory_space<vmem>>, vector<8x16xf32>
    %c0_1 = arith.constant 0 : index
    %c0_2 = arith.constant 0 : index
    %1 = vector.load %arg2[%c0_1, %c0_2] : memref<16x32xf32, #tpu.memory_space<vmem>>, vector<16x32xf32>
    %cst = arith.constant dense<0.000000e+00> : vector<8x32xf32>
    %2 = tpu.matmul %0, %1, %cst {dimension_numbers = #tpu.dot_dimension_numbers<[1], [0], [0], [1], [0, 0, 1, 1], [], []>} : vector<8x16xf32>, vector<16x32xf32>, vector<8x32xf32> -> vector<8x32xf32>
    %c0_3 = arith.constant 0 : index
    %c0_4 = arith.constant 0 : index
    %3 = vector.load %arg3[%c0_3, %c0_4] : memref<2x32xf32, #tpu.memory_space<vmem>>, vector<1x32xf32>
    %4 = vector.broadcast %3 : vector<1x32xf32> to vector<8x32xf32>
    %5 = arith.addf %2, %4 : vector<8x32xf32>
    %cst_5 = arith.constant 0.000000e+00 : f32
    %6 = vector.broadcast %cst_5 : f32 to vector<8x32xf32>
    %7 = arith.maximumf %5, %6 : vector<8x32xf32>
    %c0_6 = arith.constant 0 : index
    %c0_7 = arith.constant 0 : index
    %8 = vector.load %arg4[%c0_6, %c0_7] : memref<32x32xf32, #tpu.memory_space<vmem>>, vector<32x32xf32>
    %cst_8 = arith.constant dense<0.000000e+00> : vector<8x32xf32>
    %9 = tpu.matmul %7, %8, %cst_8 {dimension_numbers = #tpu.dot_dimension_numbers<[1], [0], [0], [1], [0, 0, 1, 1], [], []>} : vector<8x32xf32>, vector<32x32xf32>, vector<8x32xf32> -> vector<8x32xf32>
    %c1 = arith.constant 1 : index
    %c0_9 = arith.constant 0 : index
    %10 = vector.load %arg3[%c1, %c0_9] : memref<2x32xf32, #tpu.memory_space<vmem>>, vector<1x32xf32>
    %11 = vector.broadcast %10 : vector<1x32xf32> to vector<8x32xf32>
    %12 = arith.addf %9, %11 : vector<8x32xf32>
    %cst_10 = arith.constant 0.000000e+00 : f32
    %13 = vector.broadcast %cst_10 : f32 to vector<8x32xf32>
    %14 = arith.maximumf %12, %13 : vector<8x32xf32>
    %c0_11 = arith.constant 0 : index
    %c0_12 = arith.constant 0 : index
    %15 = vector.load %arg5[%c0_11, %c0_12] : memref<32x128xf32, #tpu.memory_space<vmem>>, vector<32x128xf32>
    %cst_13 = arith.constant dense<0.000000e+00> : vector<8x128xf32>
    %16 = tpu.matmul %14, %15, %cst_13 {dimension_numbers = #tpu.dot_dimension_numbers<[1], [0], [0], [1], [0, 0, 1, 1], [], []>} : vector<8x32xf32>, vector<32x128xf32>, vector<8x128xf32> -> vector<8x128xf32>
    %c0_14 = arith.constant 0 : index
    %c0_15 = arith.constant 0 : index
    %17 = vector.load %arg6[%c0_14, %c0_15] : memref<3x128xf32, #tpu.memory_space<vmem>>, vector<1x128xf32>
    %18 = vector.broadcast %17 : vector<1x128xf32> to vector<8x128xf32>
    %19 = arith.addf %16, %18 : vector<8x128xf32>
    %20 = math.tanh %19 : vector<8x128xf32>
    %c1_16 = arith.constant 1 : index
    %c0_17 = arith.constant 0 : index
    %21 = vector.load %arg6[%c1_16, %c0_17] : memref<3x128xf32, #tpu.memory_space<vmem>>, vector<1x128xf32>
    %22 = vector.broadcast %21 : vector<1x128xf32> to vector<8x128xf32>
    %23 = arith.mulf %20, %22 : vector<8x128xf32>
    %c2 = arith.constant 2 : index
    %c0_18 = arith.constant 0 : index
    %24 = vector.load %arg6[%c2, %c0_18] : memref<3x128xf32, #tpu.memory_space<vmem>>, vector<1x128xf32>
    %25 = vector.broadcast %24 : vector<1x128xf32> to vector<8x128xf32>
    %26 = arith.addf %23, %25 : vector<8x128xf32>
    %c0_19 = arith.constant 0 : index
    %c0_20 = arith.constant 0 : index
    %27 = vector.load %arg7[%c0_19, %c0_20] : memref<8x128xf32, #tpu.memory_space<vmem>>, vector<8x128xf32>
    tpu.vector_store %arg7[%c0_19, %c0_20], %26 {strides = array<i32>} : memref<8x128xf32, #tpu.memory_space<vmem>>, vector<8x128xf32>,
    return
  }
  func.func @transform_0(%arg0: i32) -> (i32, i32) {
    %c0_i32 = arith.constant 0 : i32
    %c0_i32_0 = arith.constant 0 : i32
    return %arg0, %c0_i32 : i32, i32
  }
  func.func @transform_1(%arg0: i32) -> (i32, i32) {
    %c0_i32 = arith.constant 0 : i32
    %c0_i32_0 = arith.constant 0 : i32
    %c0_i32_1 = arith.constant 0 : i32
    return %c0_i32, %c0_i32_0 : i32, i32
  }
  func.func @transform_2(%arg0: i32) -> (i32, i32) {
    %c0_i32 = arith.constant 0 : i32
    %c0_i32_0 = arith.constant 0 : i32
    %c0_i32_1 = arith.constant 0 : i32
    return %c0_i32, %c0_i32_0 : i32, i32
  }
  func.func @transform_3(%arg0: i32) -> (i32, i32) {
    %c0_i32 = arith.constant 0 : i32
    %c0_i32_0 = arith.constant 0 : i32
    %c0_i32_1 = arith.constant 0 : i32
    return %c0_i32, %c0_i32_0 : i32, i32
  }
  func.func @transform_4(%arg0: i32) -> (i32, i32) {
    %c0_i32 = arith.constant 0 : i32
    %c0_i32_0 = arith.constant 0 : i32
    %c0_i32_1 = arith.constant 0 : i32
    return %c0_i32, %c0_i32_0 : i32, i32
  }
  func.func @transform_5(%arg0: i32) -> (i32, i32) {
    %c0_i32 = arith.constant 0 : i32
    %c0_i32_0 = arith.constant 0 : i32
    %c0_i32_1 = arith.constant 0 : i32
    return %c0_i32, %c0_i32_0 : i32, i32
  }
  func.func @transform_6(%arg0: i32) -> (i32, i32) {
    %c0_i32 = arith.constant 0 : i32
    %c0_i32_0 = arith.constant 0 : i32
    return %arg0, %c0_i32 : i32, i32
  }
}

</mosaic_0001>

<llo_original>
// kernel: tpu_custom_call.1
$region0: #{tpu_custom_call.1}
  #allocation0 [shape = 'u32[]', space=smem, size = 0x4, offset = 0x4, fixed_abs, tag = 'smem constant byte address 0x4 - core index']
  #allocation1 [shape = 'u32[144,128]{1,0:T(1,128)}', space=vmem, size = 0x12000, scoped, tag = 'internal scratch']
  %s0 = inlined_call_operand.hbm [shape: f32[8,16], index: 0, kind: input, shape index: {}]
  %s1 = inlined_call_operand.hbm [shape: f32[16,32], index: 1, kind: input, shape index: {}]
  %s2 = inlined_call_operand.vmem [shape: f32[2,32], index: 2, kind: input, shape index: {}]
  %s3 = inlined_call_operand.hbm [shape: f32[32,32], index: 3, kind: input, shape index: {}]
  %s4 = inlined_call_operand.hbm [shape: f32[32,128], index: 4, kind: input, shape index: {}]
  %s5 = inlined_call_operand.vmem [shape: f32[3,128], index: 5, kind: input, shape index: {}]
  %s6 = inlined_call_operand.hbm [shape: f32[8,128], index: 6, kind: output, shape index: {}]
  %s7 = sld [smem:[#allocation0]]
  $region50: #{tpu_custom_call.1} parent=0
    _
  %s9 = ssub.s32 1, %s7
  %s10 = scalar_select 0, %s9, %s7
  $region1: #{tpu_custom_call.1} parent=0
    #allocation2 [shape = 'u8[4096]{0}', space=vmem, size = 0x1000, scoped, tag = 'input window, operand 0, single buffered']
    #allocation3 [shape = 's32[1]{0}', space=sflag, size = 0x4, scoped, tag = 'scoped memory for tpu_custom_call.1']
    #allocation4 [shape = 's32[1]{0}', space=sflag, size = 0x4, scoped, tag = 'scoped memory for tpu_custom_call.1']
    #allocation5 [shape = 'u8[8192]{0}', space=vmem, size = 0x2000, scoped, tag = 'input window, operand 1, single buffered']
    #allocation6 [shape = 's32[1]{0}', space=sflag, size = 0x4, scoped, tag = 'scoped memory for tpu_custom_call.1']
    #allocation7 [shape = 'u8[16384]{0}', space=vmem, size = 0x4000, scoped, tag = 'input window, operand 3, single buffered']
    #allocation8 [shape = 'u8[16384]{0}', space=vmem, size = 0x4000, scoped, tag = 'input window, operand 4, single buffered']
    #allocation9 [shape = 's32[1]{0}', space=sflag, size = 0x4, scoped, tag = 'scoped memory for tpu_custom_call.1']
    #allocation10 [shape = 'u8[4096]{0}', space=vmem, size = 0x1000, scoped, tag = 'output window, operand 0, single buffered']
    %11 = vsyncpa [#allocation3], 0
    %12 = vsyncpa [#allocation6], 0
    %13 = vsyncpa [#allocation9], 0
    %14 = vsyncpa [#allocation4], 0
    // Predicated region
    $region2: #{tpu_custom_call.1} parent=1 // pred_check
      _
    $region3: #{tpu_custom_call.1} parent=1 // pred_check_branch
      %16 = sbr.rel (0) target = $region5
    $region4: #{tpu_custom_call.1} parent=1 // pred_region
      %s18 = ssub.s32 128, 128
      %19 = vsyncadd [#allocation3], %s18
      %s21 = sshll.u32 [#allocation2], 4
      %s22 = int_to_ptr.vmem [resolvable:$true] %s21
      %24 = dma.hbm_to_vmem [thread:$0]  %s0, 128, %s22, [#allocation3]
    $region5: #{tpu_custom_call.1} parent=1 // pred_fallthru
      _
    // Predicated region
    $region6: #{tpu_custom_call.1} parent=1 // pred_check
      _
    $region7: #{tpu_custom_call.1} parent=1 // pred_check_branch
      %26 = sbr.rel (0) target = $region9
    $region8: #{tpu_custom_call.1} parent=1 // pred_region
      %s28 = ssub.s32 256, 256
      %29 = vsyncadd [#allocation6], %s28
      %s30 = sshll.u32 [#allocation5], 4
      %s31 = int_to_ptr.vmem [resolvable:$true] %s30
      %36 = dma.hbm_to_vmem [thread:$0]  %s1, 256, %s31, [#allocation6], 128, 128, 8
    $region9: #{tpu_custom_call.1} parent=1 // pred_fallthru
      _
    // Predicated region
    $region10: #{tpu_custom_call.1} parent=1 // pred_check
      _
    $region11: #{tpu_custom_call.1} parent=1 // pred_check_branch
      %38 = sbr.rel (0) target = $region13
    $region12: #{tpu_custom_call.1} parent=1 // pred_region
      _
    $region13: #{tpu_custom_call.1} parent=1 // pred_fallthru
      _
    // Predicated region
    $region14: #{tpu_custom_call.1} parent=1 // pred_check
      _
    $region15: #{tpu_custom_call.1} parent=1 // pred_check_branch
      %40 = sbr.rel (0) target = $region17
    $region16: #{tpu_custom_call.1} parent=1 // pred_region
      %s42 = ssub.s32 512, 512
      %43 = vsyncadd [#allocation6], %s42
      %s44 = sshll.u32 [#allocation7], 4
      %s45 = int_to_ptr.vmem [resolvable:$true] %s44
      %50 = dma.hbm_to_vmem [thread:$0]  %s3, 512, %s45, [#allocation6], 128, 128, 8
    $region17: #{tpu_custom_call.1} parent=1 // pred_fallthru
      _
    // Predicated region
    $region18: #{tpu_custom_call.1} parent=1 // pred_check
      _
    $region19: #{tpu_custom_call.1} parent=1 // pred_check_branch
      %52 = sbr.rel (0) target = $region21
    $region20: #{tpu_custom_call.1} parent=1 // pred_region
      %s54 = ssub.s32 512, 512
      %55 = vsyncadd [#allocation9], %s54
      %s56 = sshll.u32 [#allocation8], 4
      %s57 = int_to_ptr.vmem [resolvable:$true] %s56
      %62 = dma.hbm_to_vmem [thread:$0]  %s4, 512, %s57, [#allocation9], 128, 128, 8
    $region21: #{tpu_custom_call.1} parent=1 // pred_fallthru
      _
    // Predicated region
    $region22: #{tpu_custom_call.1} parent=1 // pred_check
      _
    $region23: #{tpu_custom_call.1} parent=1 // pred_check_branch
      %64 = sbr.rel (0) target = $region25
    $region24: #{tpu_custom_call.1} parent=1 // pred_region
      _
    $region25: #{tpu_custom_call.1} parent=1 // pred_fallthru
      _
    // Predicated region
    $region26: #{tpu_custom_call.1} parent=1 // pred_check
      _
    $region27: #{tpu_custom_call.1} parent=1 // pred_check_branch
      %66 = sbr.rel (0) target = $region29
    $region28: #{tpu_custom_call.1} parent=1 // pred_region
      %67 = dma.done [#allocation3], 128
    $region29: #{tpu_custom_call.1} parent=1 // pred_fallthru
      _
    // Predicated region
    $region30: #{tpu_custom_call.1} parent=1 // pred_check
      _
    $region31: #{tpu_custom_call.1} parent=1 // pred_check_branch
      %69 = sbr.rel (0) target = $region33
    $region32: #{tpu_custom_call.1} parent=1 // pred_region
      %70 = dma.done [#allocation6], 256
    $region33: #{tpu_custom_call.1} parent=1 // pred_fallthru
      _
    // Predicated region
    $region34: #{tpu_custom_call.1} parent=1 // pred_check
      _
    $region35: #{tpu_custom_call.1} parent=1 // pred_check_branch
      %72 = sbr.rel (0) target = $region37
    $region36: #{tpu_custom_call.1} parent=1 // pred_region
      %73 = dma.done [#allocation6], 512
    $region37: #{tpu_custom_call.1} parent=1 // pred_fallthru
      _
    // Predicated region
    $region38: #{tpu_custom_call.1} parent=1 // pred_check
      _
    $region39: #{tpu_custom_call.1} parent=1 // pred_check_branch
      %75 = sbr.rel (0) target = $region41
    $region40: #{tpu_custom_call.1} parent=1 // pred_region
      %76 = dma.done [#allocation9], 512
    $region41: #{tpu_custom_call.1} parent=1 // pred_fallthru
      _
    %v77 = vld [vmem:[#allocation2] sm:$0xff]
    %v78 = vld [vmem:[#allocation5] sm:$0xff]
    %v79 = vld [vmem:[#allocation5 + $0x8] sm:$0xff]
    %v80 = vld [vmem:[%s2] sm:$0x1]
    %v81 = vlaneseq
    %v82 = vshrl.u32 %v81, 7
    %v83 = vsub.s32 0, %v82
    %v84 = vrot.slane %v80, %v83
    %vm85 = vcmask 130048
    %v87 = vsel %vm85, %v77, 0
    %89 = vmatprep.subr.mxu0 0.0
    %90 = vmatpush1.msra.mxu0 %v78
    %91 = vmatprep.subr.mxu0 0.0
    %92 = vmatpush1.msra.mxu0 %v79
    %93 = vmatprep.subr.mxu0 0.0
    %94 = vmatpush1.msra.mxu0 0.0
    %95 = vmatprep.subr.mxu0 0.0
    %96 = vmatpush1.msra.mxu0 0.0
    %97 = vmatprep.subr.mxu0 0.0
    %98 = vmatpush1.msra.mxu0 0.0
    %99 = vmatprep.subr.mxu0 0.0
    %100 = vmatpush1.msra.mxu0 0.0
    %101 = vmatprep.subr.mxu0 0.0
    %102 = vmatpush1.msra.mxu0 0.0
    %103 = vmatprep.subr.mxu0 0.0
    %104 = vmatpush1.msra.mxu0 0.0
    %105 = vmatprep.subr.mxu0 0.0
    %106 = vmatpush1.msra.mxu0 0.0
    %107 = vmatprep.subr.mxu0 0.0
    %108 = vmatpush1.msra.mxu0 0.0
    %109 = vmatprep.subr.mxu0 0.0
    %110 = vmatpush1.msra.mxu0 0.0
    %111 = vmatprep.subr.mxu0 0.0
    %112 = vmatpush1.msra.mxu0 0.0
    %113 = vmatprep.subr.mxu0 0.0
    %114 = vmatpush1.msra.mxu0 0.0
    %115 = vmatprep.subr.mxu0 0.0
    %116 = vmatpush1.msra.mxu0 0.0
    %117 = vmatprep.subr.mxu0 0.0
    %118 = vmatpush1.msra.mxu0 0.0
    %119 = vmatprep.subr.mxu0 0.0
    %120 = vmatpush1.msra.mxu0 0.0
    %121 = vmatprep.subr.mxu0 0.0
    %122 = vmatpush1.msra.mxu0 0.0
    %123 = vmatprep.subr.mxu0 0.0
    %124 = vmatpush1.msra.mxu0 0.0
    %125 = vmatprep.subr.mxu0 0.0
    %126 = vmatpush1.msra.mxu0 0.0
    %127 = vmatprep.subr.mxu0 0.0
    %128 = vmatpush1.msra.mxu0 0.0
    %129 = vmatprep.subr.mxu0 0.0
    %130 = vmatpush1.msra.mxu0 0.0
    %131 = vmatprep.subr.mxu0 0.0
    %132 = vmatpush1.msra.mxu0 0.0
    %133 = vmatprep.subr.mxu0 0.0
    %134 = vmatpush1.msra.mxu0 0.0
    %135 = vmatprep.subr.mxu0 0.0
    %136 = vmatpush1.msra.mxu0 0.0
    %137 = vmatprep.subr.mxu0 0.0
    %138 = vmatpush1.msra.mxu0 0.0
    %139 = vmatprep.subr.mxu0 0.0
    %140 = vmatpush1.msra.mxu0 0.0
    %141 = vmatprep.subr.mxu0 0.0
    %142 = vmatpush1.msra.mxu0 0.0
    %143 = vmatprep.subr.mxu0 0.0
    %144 = vmatpush1.msra.mxu0 0.0
    %145 = vmatprep.subr.mxu0 0.0
    %146 = vmatpush1.msra.mxu0 0.0
    %147 = vmatprep.subr.mxu0 0.0
    %148 = vmatpush1.msra.mxu0 0.0
    %149 = vmatprep.subr.mxu0 0.0
    %150 = vmatpush1.msra.mxu0 0.0
    %151 = vmatprep.subr.mxu0 0.0
    %152 = vmatpush1.msra.mxu0 0.0
    %153 = vmatprep.mubr.f32.mxu0 0.0
    %154 = vmatmul.mubr.f32.gmra.mrb[0].mxu0 %v87
    %v155 = vpop.f32.mrb[0].mxu0
    %v156 = vadd.f32 %v84, %v155
    %v157 = vpop.f32.mrb[0].mxu0
    %158 = vdwg.mxu0
    %v159 = vmax.f32 %v156, 0.0
    %v160 = vld [vmem:[#allocation7] sm:$0xff]
    %v161 = vld [vmem:[#allocation7 + $0x8] sm:$0xff]
    %v162 = vld [vmem:[#allocation7 + $0x10] sm:$0xff]
    %v163 = vld [vmem:[#allocation7 + $0x18] sm:$0xff]
    %v164 = vld [vmem:[%s2 + $0x1] sm:$0x1]
    %v165 = vlaneseq
    %v166 = vshrl.u32 %v165, 7
    %v167 = vsub.s32 0, %v166
    %v168 = vrot.slane %v164, %v167
    %vm169 = vcmask 261120
    %v171 = vsel %vm169, %v159, 0
    %173 = vmatprep.subr.mxu0 0.0
    %174 = vmatpush1.msra.mxu0 %v160
    %175 = vmatprep.subr.mxu0 0.0
    %176 = vmatpush1.msra.mxu0 %v161
    %177 = vmatprep.subr.mxu0 0.0
    %178 = vmatpush1.msra.mxu0 %v162
    %179 = vmatprep.subr.mxu0 0.0
    %180 = vmatpush1.msra.mxu0 %v163
    %181 = vmatprep.subr.mxu0 0.0
    %182 = vmatpush1.msra.mxu0 0.0
    %183 = vmatprep.subr.mxu0 0.0
    %184 = vmatpush1.msra.mxu0 0.0
    %185 = vmatprep.subr.mxu0 0.0
    %186 = vmatpush1.msra.mxu0 0.0
    %187 = vmatprep.subr.mxu0 0.0
    %188 = vmatpush1.msra.mxu0 0.0
    %189 = vmatprep.subr.mxu0 0.0
    %190 = vmatpush1.msra.mxu0 0.0
    %191 = vmatprep.subr.mxu0 0.0
    %192 = vmatpush1.msra.mxu0 0.0
    %193 = vmatprep.subr.mxu0 0.0
    %194 = vmatpush1.msra.mxu0 0.0
    %195 = vmatprep.subr.mxu0 0.0
    %196 = vmatpush1.msra.mxu0 0.0
    %197 = vmatprep.subr.mxu0 0.0
    %198 = vmatpush1.msra.mxu0 0.0
    %199 = vmatprep.subr.mxu0 0.0
    %200 = vmatpush1.msra.mxu0 0.0
    %201 = vmatprep.subr.mxu0 0.0
    %202 = vmatpush1.msra.mxu0 0.0
    %203 = vmatprep.subr.mxu0 0.0
    %204 = vmatpush1.msra.mxu0 0.0
    %205 = vmatprep.subr.mxu0 0.0
    %206 = vmatpush1.msra.mxu0 0.0
    %207 = vmatprep.subr.mxu0 0.0
    %208 = vmatpush1.msra.mxu0 0.0
    %209 = vmatprep.subr.mxu0 0.0
    %210 = vmatpush1.msra.mxu0 0.0
    %211 = vmatprep.subr.mxu0 0.0
    %212 = vmatpush1.msra.mxu0 0.0
    %213 = vmatprep.subr.mxu0 0.0
    %214 = vmatpush1.msra.mxu0 0.0
    %215 = vmatprep.subr.mxu0 0.0
    %216 = vmatpush1.msra.mxu0 0.0
    %217 = vmatprep.subr.mxu0 0.0
    %218 = vmatpush1.msra.mxu0 0.0
    %219 = vmatprep.subr.mxu0 0.0
    %220 = vmatpush1.msra.mxu0 0.0
    %221 = vmatprep.subr.mxu0 0.0
    %222 = vmatpush1.msra.mxu0 0.0
    %223 = vmatprep.subr.mxu0 0.0
    %224 = vmatpush1.msra.mxu0 0.0
    %225 = vmatprep.subr.mxu0 0.0
    %226 = vmatpush1.msra.mxu0 0.0
    %227 = vmatprep.subr.mxu0 0.0
    %228 = vmatpush1.msra.mxu0 0.0
    %229 = vmatprep.subr.mxu0 0.0
    %230 = vmatpush1.msra.mxu0 0.0
    %231 = vmatprep.subr.mxu0 0.0
    %232 = vmatpush1.msra.mxu0 0.0
    %233 = vmatprep.subr.mxu0 0.0
    %234 = vmatpush1.msra.mxu0 0.0
    %235 = vmatprep.subr.mxu0 0.0
    %236 = vmatpush1.msra.mxu0 0.0
    %237 = vmatprep.mubr.f32.mxu0 0.0
    %238 = vmatmul.mubr.f32.gmra.mrb[0].mxu0 %v171
    %v239 = vpop.f32.mrb[0].mxu0
    %v240 = vadd.f32 %v168, %v239
    %v241 = vpop.f32.mrb[0].mxu0
    %242 = vdwg.mxu0
    %v243 = vmax.f32 %v240, 0.0
    %v244 = vld [vmem:[#allocation8] sm:$0xff]
    %v245 = vld [vmem:[#allocation8 + $0x8] sm:$0xff]
    %v246 = vld [vmem:[#allocation8 + $0x10] sm:$0xff]
    %v247 = vld [vmem:[#allocation8 + $0x18] sm:$0xff]
    %v248 = vld [vmem:[%s5] sm:$0x1]
    %v249 = vlaneseq
    %v250 = vshrl.u32 %v249, 7
    %v251 = vsub.s32 0, %v250
    %v252 = vrot.slane %v248, %v251
    %v254 = vsel %vm169, %v243, 0
    %256 = vmatprep.subr.mxu0 0.0
    %257 = vmatpush1.msra.mxu0 %v244
    %258 = vmatprep.subr.mxu0 0.0
    %259 = vmatpush1.msra.mxu0 %v245
    %260 = vmatprep.subr.mxu0 0.0
    %261 = vmatpush1.msra.mxu0 %v246
    %262 = vmatprep.subr.mxu0 0.0
    %263 = vmatpush1.msra.mxu0 %v247
    %264 = vmatprep.subr.mxu0 0.0
    %265 = vmatpush1.msra.mxu0 0.0
    %266 = vmatprep.subr.mxu0 0.0
    %267 = vmatpush1.msra.mxu0 0.0
    %268 = vmatprep.subr.mxu0 0.0
    %269 = vmatpush1.msra.mxu0 0.0
    %270 = vmatprep.subr.mxu0 0.0
    %271 = vmatpush1.msra.mxu0 0.0
    %272 = vmatprep.subr.mxu0 0.0
    %273 = vmatpush1.msra.mxu0 0.0
    %274 = vmatprep.subr.mxu0 0.0
    %275 = vmatpush1.msra.mxu0 0.0
    %276 = vmatprep.subr.mxu0 0.0
    %277 = vmatpush1.msra.mxu0 0.0
    %278 = vmatprep.subr.mxu0 0.0
    %279 = vmatpush1.msra.mxu0 0.0
    %280 = vmatprep.subr.mxu0 0.0
    %281 = vmatpush1.msra.mxu0 0.0
    %282 = vmatprep.subr.mxu0 0.0
    %283 = vmatpush1.msra.mxu0 0.0
    %284 = vmatprep.subr.mxu0 0.0
    %285 = vmatpush1.msra.mxu0 0.0
    %286 = vmatprep.subr.mxu0 0.0
    %287 = vmatpush1.msra.mxu0 0.0
    %288 = vmatprep.subr.mxu0 0.0
    %289 = vmatpush1.msra.mxu0 0.0
    %290 = vmatprep.subr.mxu0 0.0
    %291 = vmatpush1.msra.mxu0 0.0
    %292 = vmatprep.subr.mxu0 0.0
    %293 = vmatpush1.msra.mxu0 0.0
    %294 = vmatprep.subr.mxu0 0.0
    %295 = vmatpush1.msra.mxu0 0.0
    %296 = vmatprep.subr.mxu0 0.0
    %297 = vmatpush1.msra.mxu0 0.0
    %298 = vmatprep.subr.mxu0 0.0
    %299 = vmatpush1.msra.mxu0 0.0
    %300 = vmatprep.subr.mxu0 0.0
    %301 = vmatpush1.msra.mxu0 0.0
    %302 = vmatprep.subr.mxu0 0.0
    %303 = vmatpush1.msra.mxu0 0.0
    %304 = vmatprep.subr.mxu0 0.0
    %305 = vmatpush1.msra.mxu0 0.0
    %306 = vmatprep.subr.mxu0 0.0
    %307 = vmatpush1.msra.mxu0 0.0
    %308 = vmatprep.subr.mxu0 0.0
    %309 = vmatpush1.msra.mxu0 0.0
    %310 = vmatprep.subr.mxu0 0.0
    %311 = vmatpush1.msra.mxu0 0.0
    %312 = vmatprep.subr.mxu0 0.0
    %313 = vmatpush1.msra.mxu0 0.0
    %314 = vmatprep.subr.mxu0 0.0
    %315 = vmatpush1.msra.mxu0 0.0
    %316 = vmatprep.subr.mxu0 0.0
    %317 = vmatpush1.msra.mxu0 0.0
    %318 = vmatprep.subr.mxu0 0.0
    %319 = vmatpush1.msra.mxu0 0.0
    %320 = vmatprep.mubr.f32.mxu0 0.0
    %321 = vmatmul.mubr.f32.gmra.mrb[0].mxu0 %v254
    %v322 = vpop.f32.mrb[0].mxu0
    %v323 = vadd.f32 %v252, %v322
    %v324 = vpop.f32.mrb[0].mxu0
    %325 = vdwg.mxu0
    %v326 = vtanh.pop %v323
    %v327 = vld [vmem:[%s5 + $0x1] sm:$0x1]
    %v328 = vlaneseq
    %v329 = vshrl.u32 %v328, 7
    %v330 = vsub.s32 0, %v329
    %v331 = vrot.slane %v327, %v330
    %v332 = vmul.f32 %v326, %v331
    %v333 = vld [vmem:[%s5 + $0x2] sm:$0x1]
    %v334 = vlaneseq
    %v335 = vshrl.u32 %v334, 7
    %v336 = vsub.s32 0, %v335
    %v337 = vrot.slane %v333, %v336
    %v338 = vadd.f32 %v332, %v337
    %339 = vst [vmem:[#allocation10] sm:$0xff] %v338
    // Predicated region
    $region42: #{tpu_custom_call.1} parent=1 // pred_check
      _
    $region43: #{tpu_custom_call.1} parent=1 // pred_check_branch
      %341 = sbr.rel (0) target = $region45
    $region44: #{tpu_custom_call.1} parent=1 // pred_region
      %s343 = ssub.s32 128, 128
      %344 = vsyncadd [#allocation4], %s343
      %s346 = sshll.u32 [#allocation10], 4
      %s347 = int_to_ptr.vmem [resolvable:$true] %s346
      %349 = dma.vmem_to_hbm [thread:$0]  %s347, 128, %s6, [#allocation4]
    $region45: #{tpu_custom_call.1} parent=1 // pred_fallthru
      _
    // Predicated region
    $region46: #{tpu_custom_call.1} parent=1 // pred_check
      _
    $region47: #{tpu_custom_call.1} parent=1 // pred_check_branch
      %351 = sbr.rel (0) target = $region49
    $region48: #{tpu_custom_call.1} parent=1 // pred_region
      %352 = dma.done [#allocation4], 128
    $region49: #{tpu_custom_call.1} parent=1 // pred_fallthru
      _
    %353 = vsyncpa [#allocation3], 1
    %354 = vsyncpa [#allocation6], 1
    %355 = vsyncpa [#allocation9], 1
    %356 = vsyncpa [#allocation4], 1

// kernel: tpu_custom_call.1
$region0: #{tpu_custom_call.1}
  #allocation0 [shape = 'u32[]', space=smem, size = 0x4, offset = 0x4, fixed_abs, tag = 'smem constant byte address 0x4 - core index']
  #allocation1 [shape = 'u32[144,128]{1,0:T(1,128)}', space=vmem, size = 0x12000, scoped, tag = 'internal scratch']
  %s0 = inlined_call_operand.hbm [shape: f32[8,16], index: 0, kind: input, shape index: {}]
  %s1 = inlined_call_operand.hbm [shape: f32[16,32], index: 1, kind: input, shape index: {}]
  %s2 = inlined_call_operand.vmem [shape: f32[2,32], index: 2, kind: input, shape index: {}]
  %s3 = inlined_call_operand.hbm [shape: f32[32,32], index: 3, kind: input, shape index: {}]
  %s4 = inlined_call_operand.hbm [shape: f32[32,128], index: 4, kind: input, shape index: {}]
  %s5 = inlined_call_operand.vmem [shape: f32[3,128], index: 5, kind: input, shape index: {}]
  %s6 = inlined_call_operand.hbm [shape: f32[8,128], index: 6, kind: output, shape index: {}]
  %s7 = sld [smem:[#allocation0]]
  $region50: #{tpu_custom_call.1} parent=0
    _
  %s9 = ssub.s32 1, %s7
  %s10 = scalar_select 0, %s9, %s7
  $region1: #{tpu_custom_call.1} parent=0
    #allocation2 [shape = 'u8[4096]{0}', space=vmem, size = 0x1000, scoped, tag = 'input window, operand 0, single buffered']
    #allocation3 [shape = 's32[1]{0}', space=sflag, size = 0x4, scoped, tag = 'scoped memory for tpu_custom_call.1']
    #allocation4 [shape = 's32[1]{0}', space=sflag, size = 0x4, scoped, tag = 'scoped memory for tpu_custom_call.1']
    #allocation5 [shape = 'u8[8192]{0}', space=vmem, size = 0x2000, scoped, tag = 'input window, operand 1, single buffered']
    #allocation6 [shape = 's32[1]{0}', space=sflag, size = 0x4, scoped, tag = 'scoped memory for tpu_custom_call.1']
    #allocation7 [shape = 'u8[16384]{0}', space=vmem, size = 0x4000, scoped, tag = 'input window, operand 3, single buffered']
    #allocation8 [shape = 'u8[16384]{0}', space=vmem, size = 0x4000, scoped, tag = 'input window, operand 4, single buffered']
    #allocation9 [shape = 's32[1]{0}', space=sflag, size = 0x4, scoped, tag = 'scoped memory for tpu_custom_call.1']
    #allocation10 [shape = 'u8[4096]{0}', space=vmem, size = 0x1000, scoped, tag = 'output window, operand 0, single buffered']
    %11 = vsyncpa [#allocation3], 0
    %12 = vsyncpa [#allocation6], 0
    %13 = vsyncpa [#allocation9], 0
    %14 = vsyncpa [#allocation4], 0
    // Predicated region
    $region2: #{tpu_custom_call.1} parent=1 // pred_check
      _
    $region3: #{tpu_custom_call.1} parent=1 // pred_check_branch
      %16 = sbr.rel (0) target = $region5
    $region4: #{tpu_custom_call.1} parent=1 // pred_region
      %s18 = ssub.s32 128, 128
      %19 = vsyncadd [#allocation3], %s18
      %s21 = sshll.u32 [#allocation2], 4
      %s22 = int_to_ptr.vmem [resolvable:$true] %s21
      %24 = dma.hbm_to_vmem [thread:$0]  %s0, 128, %s22, [#allocation3]
    $region5: #{tpu_custom_call.1} parent=1 // pred_fallthru
      _
    // Predicated region
    $region6: #{tpu_custom_call.1} parent=1 // pred_check
      _
    $region7: #{tpu_custom_call.1} parent=1 // pred_check_branch
      %26 = sbr.rel (0) target = $region9
    $region8: #{tpu_custom_call.1} parent=1 // pred_region
      %s28 = ssub.s32 256, 256
      %29 = vsyncadd [#allocation6], %s28
      %s30 = sshll.u32 [#allocation5], 4
      %s31 = int_to_ptr.vmem [resolvable:$true] %s30
      %36 = dma.hbm_to_vmem [thread:$0]  %s1, 256, %s31, [#allocation6], 128, 128, 8
    $region9: #{tpu_custom_call.1} parent=1 // pred_fallthru
      _
    // Predicated region
    $region10: #{tpu_custom_call.1} parent=1 // pred_check
      _
    $region11: #{tpu_custom_call.1} parent=1 // pred_check_branch
      %38 = sbr.rel (0) target = $region13
    $region12: #{tpu_custom_call.1} parent=1 // pred_region
      _
    $region13: #{tpu_custom_call.1} parent=1 // pred_fallthru
      _
    // Predicated region
    $region14: #{tpu_custom_call.1} parent=1 // pred_check
      _
    $region15: #{tpu_custom_call.1} parent=1 // pred_check_branch
      %40 = sbr.rel (0) target = $region17
    $region16: #{tpu_custom_call.1} parent=1 // pred_region
      %s42 = ssub.s32 512, 512
      %43 = vsyncadd [#allocation6], %s42
      %s44 = sshll.u32 [#allocation7], 4
      %s45 = int_to_ptr.vmem [resolvable:$true] %s44
      %50 = dma.hbm_to_vmem [thread:$0]  %s3, 512, %s45, [#allocation6], 128, 128, 8
    $region17: #{tpu_custom_call.1} parent=1 // pred_fallthru
      _
    // Predicated region
    $region18: #{tpu_custom_call.1} parent=1 // pred_check
      _
    $region19: #{tpu_custom_call.1} parent=1 // pred_check_branch
      %52 = sbr.rel (0) target = $region21
    $region20: #{tpu_custom_call.1} parent=1 // pred_region
      %s54 = ssub.s32 512, 512
      %55 = vsyncadd [#allocation9], %s54
      %s56 = sshll.u32 [#allocation8], 4
      %s57 = int_to_ptr.vmem [resolvable:$true] %s56
      %62 = dma.hbm_to_vmem [thread:$0]  %s4, 512, %s57, [#allocation9], 128, 128, 8
    $region21: #{tpu_custom_call.1} parent=1 // pred_fallthru
      _
    // Predicated region
    $region22: #{tpu_custom_call.1} parent=1 // pred_check
      _
    $region23: #{tpu_custom_call.1} parent=1 // pred_check_branch
      %64 = sbr.rel (0) target = $region25
    $region24: #{tpu_custom_call.1} parent=1 // pred_region
      _
    $region25: #{tpu_custom_call.1} parent=1 // pred_fallthru
      _
    // Predicated region
    $region26: #{tpu_custom_call.1} parent=1 // pred_check
      _
    $region27: #{tpu_custom_call.1} parent=1 // pred_check_branch
      %66 = sbr.rel (0) target = $region29
    $region28: #{tpu_custom_call.1} parent=1 // pred_region
      %67 = dma.done [#allocation3], 128
    $region29: #{tpu_custom_call.1} parent=1 // pred_fallthru
      _
    // Predicated region
    $region30: #{tpu_custom_call.1} parent=1 // pred_check
      _
    $region31: #{tpu_custom_call.1} parent=1 // pred_check_branch
      %69 = sbr.rel (0) target = $region33
    $region32: #{tpu_custom_call.1} parent=1 // pred_region
      %70 = dma.done [#allocation6], 256
    $region33: #{tpu_custom_call.1} parent=1 // pred_fallthru
      _
    // Predicated region
    $region34: #{tpu_custom_call.1} parent=1 // pred_check
      _
    $region35: #{tpu_custom_call.1} parent=1 // pred_check_branch
      %72 = sbr.rel (0) target = $region37
    $region36: #{tpu_custom_call.1} parent=1 // pred_region
      %73 = dma.done [#allocation6], 512
    $region37: #{tpu_custom_call.1} parent=1 // pred_fallthru
      _
    // Predicated region
    $region38: #{tpu_custom_call.1} parent=1 // pred_check
      _
    $region39: #{tpu_custom_call.1} parent=1 // pred_check_branch
      %75 = sbr.rel (0) target = $region41
    $region40: #{tpu_custom_call.1} parent=1 // pred_region
      %76 = dma.done [#allocation9], 512
    $region41: #{tpu_custom_call.1} parent=1 // pred_fallthru
      _
    %v77 = vld [vmem:[#allocation2] sm:$0xff]
    %v78 = vld [vmem:[#allocation5] sm:$0xff]
    %v79 = vld [vmem:[#allocation5 + $0x8] sm:$0xff]
    %v80 = vld [vmem:[%s2] sm:$0x1]
    %v81 = vlaneseq
    %v82 = vshrl.u32 %v81, 7
    %v83 = vsub.s32 0, %v82
    %v84 = vrot.slane %v80, %v83
    %vm85 = vcmask 130048
    %v87 = vsel %vm85, %v77, 0
    %89 = vmatprep.subr.mxu0 0.0
    %90 = vmatpush1.msra.mxu0 %v78
    %91 = vmatprep.subr.mxu0 0.0
    %92 = vmatpush1.msra.mxu0 %v79
    %93 = vmatprep.subr.mxu0 0.0
    %94 = vmatpush1.msra.mxu0 0.0
    %95 = vmatprep.subr.mxu0 0.0
    %96 = vmatpush1.msra.mxu0 0.0
    %97 = vmatprep.subr.mxu0 0.0
    %98 = vmatpush1.msra.mxu0 0.0
    %99 = vmatprep.subr.mxu0 0.0
    %100 = vmatpush1.msra.mxu0 0.0
    %101 = vmatprep.subr.mxu0 0.0
    %102 = vmatpush1.msra.mxu0 0.0
    %103 = vmatprep.subr.mxu0 0.0
    %104 = vmatpush1.msra.mxu0 0.0
    %105 = vmatprep.subr.mxu0 0.0
    %106 = vmatpush1.msra.mxu0 0.0
    %107 = vmatprep.subr.mxu0 0.0
    %108 = vmatpush1.msra.mxu0 0.0
    %109 = vmatprep.subr.mxu0 0.0
    %110 = vmatpush1.msra.mxu0 0.0
    %111 = vmatprep.subr.mxu0 0.0
    %112 = vmatpush1.msra.mxu0 0.0
    %113 = vmatprep.subr.mxu0 0.0
    %114 = vmatpush1.msra.mxu0 0.0
    %115 = vmatprep.subr.mxu0 0.0
    %116 = vmatpush1.msra.mxu0 0.0
    %117 = vmatprep.subr.mxu0 0.0
    %118 = vmatpush1.msra.mxu0 0.0
    %119 = vmatprep.subr.mxu0 0.0
    %120 = vmatpush1.msra.mxu0 0.0
    %121 = vmatprep.subr.mxu0 0.0
    %122 = vmatpush1.msra.mxu0 0.0
    %123 = vmatprep.subr.mxu0 0.0
    %124 = vmatpush1.msra.mxu0 0.0
    %125 = vmatprep.subr.mxu0 0.0
    %126 = vmatpush1.msra.mxu0 0.0
    %127 = vmatprep.subr.mxu0 0.0
    %128 = vmatpush1.msra.mxu0 0.0
    %129 = vmatprep.subr.mxu0 0.0
    %130 = vmatpush1.msra.mxu0 0.0
    %131 = vmatprep.subr.mxu0 0.0
    %132 = vmatpush1.msra.mxu0 0.0
    %133 = vmatprep.subr.mxu0 0.0
    %134 = vmatpush1.msra.mxu0 0.0
    %135 = vmatprep.subr.mxu0 0.0
    %136 = vmatpush1.msra.mxu0 0.0
    %137 = vmatprep.subr.mxu0 0.0
    %138 = vmatpush1.msra.mxu0 0.0
    %139 = vmatprep.subr.mxu0 0.0
    %140 = vmatpush1.msra.mxu0 0.0
    %141 = vmatprep.subr.mxu0 0.0
    %142 = vmatpush1.msra.mxu0 0.0
    %143 = vmatprep.subr.mxu0 0.0
    %144 = vmatpush1.msra.mxu0 0.0
    %145 = vmatprep.subr.mxu0 0.0
    %146 = vmatpush1.msra.mxu0 0.0
    %147 = vmatprep.subr.mxu0 0.0
    %148 = vmatpush1.msra.mxu0 0.0
    %149 = vmatprep.subr.mxu0 0.0
    %150 = vmatpush1.msra.mxu0 0.0
    %151 = vmatprep.subr.mxu0 0.0
    %152 = vmatpush1.msra.mxu0 0.0
    %153 = vmatprep.mubr.f32.mxu0 0.0
    %154 = vmatmul.mubr.f32.gmra.mrb[0].mxu0 %v87
    %v155 = vpop.f32.mrb[0].mxu0
    %v156 = vadd.f32 %v84, %v155
    %v157 = vpop.f32.mrb[0].mxu0
    %158 = vdwg.mxu0
    %v159 = vmax.f32 %v156, 0.0
    %v160 = vld [vmem:[#allocation7] sm:$0xff]
    %v161 = vld [vmem:[#allocation7 + $0x8] sm:$0xff]
    %v162 = vld [vmem:[#allocation7 + $0x10] sm:$0xff]
    %v163 = vld [vmem:[#allocation7 + $0x18] sm:$0xff]
    %v164 = vld [vmem:[%s2 + $0x1] sm:$0x1]
    %v165 = vlaneseq
    %v166 = vshrl.u32 %v165, 7
    %v167 = vsub.s32 0, %v166
    %v168 = vrot.slane %v164, %v167
    %vm169 = vcmask 261120
    %v171 = vsel %vm169, %v159, 0
    %173 = vmatprep.subr.mxu0 0.0
    %174 = vmatpush1.msra.mxu0 %v160
    %175 = vmatprep.subr.mxu0 0.0
    %176 = vmatpush1.msra.mxu0 %v161
    %177 = vmatprep.subr.mxu0 0.0
    %178 = vmatpush1.msra.mxu0 %v162
    %179 = vmatprep.subr.mxu0 0.0
    %180 = vmatpush1.msra.mxu0 %v163
    %181 = vmatprep.subr.mxu0 0.0
    %182 = vmatpush1.msra.mxu0 0.0
    %183 = vmatprep.subr.mxu0 0.0
    %184 = vmatpush1.msra.mxu0 0.0
    %185 = vmatprep.subr.mxu0 0.0
    %186 = vmatpush1.msra.mxu0 0.0
    %187 = vmatprep.subr.mxu0 0.0
    %188 = vmatpush1.msra.mxu0 0.0
    %189 = vmatprep.subr.mxu0 0.0
    %190 = vmatpush1.msra.mxu0 0.0
    %191 = vmatprep.subr.mxu0 0.0
    %192 = vmatpush1.msra.mxu0 0.0
    %193 = vmatprep.subr.mxu0 0.0
    %194 = vmatpush1.msra.mxu0 0.0
    %195 = vmatprep.subr.mxu0 0.0
    %196 = vmatpush1.msra.mxu0 0.0
    %197 = vmatprep.subr.mxu0 0.0
    %198 = vmatpush1.msra.mxu0 0.0
    %199 = vmatprep.subr.mxu0 0.0
    %200 = vmatpush1.msra.mxu0 0.0
    %201 = vmatprep.subr.mxu0 0.0
    %202 = vmatpush1.msra.mxu0 0.0
    %203 = vmatprep.subr.mxu0 0.0
    %204 = vmatpush1.msra.mxu0 0.0
    %205 = vmatprep.subr.mxu0 0.0
    %206 = vmatpush1.msra.mxu0 0.0
    %207 = vmatprep.subr.mxu0 0.0
    %208 = vmatpush1.msra.mxu0 0.0
    %209 = vmatprep.subr.mxu0 0.0
    %210 = vmatpush1.msra.mxu0 0.0
    %211 = vmatprep.subr.mxu0 0.0
    %212 = vmatpush1.msra.mxu0 0.0
    %213 = vmatprep.subr.mxu0 0.0
    %214 = vmatpush1.msra.mxu0 0.0
    %215 = vmatprep.subr.mxu0 0.0
    %216 = vmatpush1.msra.mxu0 0.0
    %217 = vmatprep.subr.mxu0 0.0
    %218 = vmatpush1.msra.mxu0 0.0
    %219 = vmatprep.subr.mxu0 0.0
    %220 = vmatpush1.msra.mxu0 0.0
    %221 = vmatprep.subr.mxu0 0.0
    %222 = vmatpush1.msra.mxu0 0.0
    %223 = vmatprep.subr.mxu0 0.0
    %224 = vmatpush1.msra.mxu0 0.0
    %225 = vmatprep.subr.mxu0 0.0
    %226 = vmatpush1.msra.mxu0 0.0
    %227 = vmatprep.subr.mxu0 0.0
    %228 = vmatpush1.msra.mxu0 0.0
    %229 = vmatprep.subr.mxu0 0.0
    %230 = vmatpush1.msra.mxu0 0.0
    %231 = vmatprep.subr.mxu0 0.0
    %232 = vmatpush1.msra.mxu0 0.0
    %233 = vmatprep.subr.mxu0 0.0
    %234 = vmatpush1.msra.mxu0 0.0
    %235 = vmatprep.subr.mxu0 0.0
    %236 = vmatpush1.msra.mxu0 0.0
    %237 = vmatprep.mubr.f32.mxu0 0.0
    %238 = vmatmul.mubr.f32.gmra.mrb[0].mxu0 %v171
    %v239 = vpop.f32.mrb[0].mxu0
    %v240 = vadd.f32 %v168, %v239
    %v241 = vpop.f32.mrb[0].mxu0
    %242 = vdwg.mxu0
    %v243 = vmax.f32 %v240, 0.0
    %v244 = vld [vmem:[#allocation8] sm:$0xff]
    %v245 = vld [vmem:[#allocation8 + $0x8] sm:$0xff]
    %v246 = vld [vmem:[#allocation8 + $0x10] sm:$0xff]
    %v247 = vld [vmem:[#allocation8 + $0x18] sm:$0xff]
    %v248 = vld [vmem:[%s5] sm:$0x1]
    %v249 = vlaneseq
    %v250 = vshrl.u32 %v249, 7
    %v251 = vsub.s32 0, %v250
    %v252 = vrot.slane %v248, %v251
    %v254 = vsel %vm169, %v243, 0
    %256 = vmatprep.subr.mxu0 0.0
    %257 = vmatpush1.msra.mxu0 %v244
    %258 = vmatprep.subr.mxu0 0.0
    %259 = vmatpush1.msra.mxu0 %v245
    %260 = vmatprep.subr.mxu0 0.0
    %261 = vmatpush1.msra.mxu0 %v246
    %262 = vmatprep.subr.mxu0 0.0
    %263 = vmatpush1.msra.mxu0 %v247
    %264 = vmatprep.subr.mxu0 0.0
    %265 = vmatpush1.msra.mxu0 0.0
    %266 = vmatprep.subr.mxu0 0.0
    %267 = vmatpush1.msra.mxu0 0.0
    %268 = vmatprep.subr.mxu0 0.0
    %269 = vmatpush1.msra.mxu0 0.0
    %270 = vmatprep.subr.mxu0 0.0
    %271 = vmatpush1.msra.mxu0 0.0
    %272 = vmatprep.subr.mxu0 0.0
    %273 = vmatpush1.msra.mxu0 0.0
    %274 = vmatprep.subr.mxu0 0.0
    %275 = vmatpush1.msra.mxu0 0.0
    %276 = vmatprep.subr.mxu0 0.0
    %277 = vmatpush1.msra.mxu0 0.0
    %278 = vmatprep.subr.mxu0 0.0
    %279 = vmatpush1.msra.mxu0 0.0
    %280 = vmatprep.subr.mxu0 0.0
    %281 = vmatpush1.msra.mxu0 0.0
    %282 = vmatprep.subr.mxu0 0.0
    %283 = vmatpush1.msra.mxu0 0.0
    %284 = vmatprep.subr.mxu0 0.0
    %285 = vmatpush1.msra.mxu0 0.0
    %286 = vmatprep.subr.mxu0 0.0
    %287 = vmatpush1.msra.mxu0 0.0
    %288 = vmatprep.subr.mxu0 0.0
    %289 = vmatpush1.msra.mxu0 0.0
    %290 = vmatprep.subr.mxu0 0.0
    %291 = vmatpush1.msra.mxu0 0.0
    %292 = vmatprep.subr.mxu0 0.0
    %293 = vmatpush1.msra.mxu0 0.0
    %294 = vmatprep.subr.mxu0 0.0
    %295 = vmatpush1.msra.mxu0 0.0
    %296 = vmatprep.subr.mxu0 0.0
    %297 = vmatpush1.msra.mxu0 0.0
    %298 = vmatprep.subr.mxu0 0.0
    %299 = vmatpush1.msra.mxu0 0.0
    %300 = vmatprep.subr.mxu0 0.0
    %301 = vmatpush1.msra.mxu0 0.0
    %302 = vmatprep.subr.mxu0 0.0
    %303 = vmatpush1.msra.mxu0 0.0
    %304 = vmatprep.subr.mxu0 0.0
    %305 = vmatpush1.msra.mxu0 0.0
    %306 = vmatprep.subr.mxu0 0.0
    %307 = vmatpush1.msra.mxu0 0.0
    %308 = vmatprep.subr.mxu0 0.0
    %309 = vmatpush1.msra.mxu0 0.0
    %310 = vmatprep.subr.mxu0 0.0
    %311 = vmatpush1.msra.mxu0 0.0
    %312 = vmatprep.subr.mxu0 0.0
    %313 = vmatpush1.msra.mxu0 0.0
    %314 = vmatprep.subr.mxu0 0.0
    %315 = vmatpush1.msra.mxu0 0.0
    %316 = vmatprep.subr.mxu0 0.0
    %317 = vmatpush1.msra.mxu0 0.0
    %318 = vmatprep.subr.mxu0 0.0
    %319 = vmatpush1.msra.mxu0 0.0
    %320 = vmatprep.mubr.f32.mxu0 0.0
    %321 = vmatmul.mubr.f32.gmra.mrb[0].mxu0 %v254
    %v322 = vpop.f32.mrb[0].mxu0
    %v323 = vadd.f32 %v252, %v322
    %v324 = vpop.f32.mrb[0].mxu0
    %325 = vdwg.mxu0
    %v326 = vtanh.pop %v323
    %v327 = vld [vmem:[%s5 + $0x1] sm:$0x1]
    %v328 = vlaneseq
    %v329 = vshrl.u32 %v328, 7
    %v330 = vsub.s32 0, %v329
    %v331 = vrot.slane %v327, %v330
    %v332 = vmul.f32 %v326, %v331
    %v333 = vld [vmem:[%s5 + $0x2] sm:$0x1]
    %v334 = vlaneseq
    %v335 = vshrl.u32 %v334, 7
    %v336 = vsub.s32 0, %v335
    %v337 = vrot.slane %v333, %v336
    %v338 = vadd.f32 %v332, %v337
    %339 = vst [vmem:[#allocation10] sm:$0xff] %v338
    // Predicated region
    $region42: #{tpu_custom_call.1} parent=1 // pred_check
      _
    $region43: #{tpu_custom_call.1} parent=1 // pred_check_branch
      %341 = sbr.rel (0) target = $region45
    $region44: #{tpu_custom_call.1} parent=1 // pred_region
      %s343 = ssub.s32 128, 128
      %344 = vsyncadd [#allocation4], %s343
      %s346 = sshll.u32 [#allocation10], 4
      %s347 = int_to_ptr.vmem [resolvable:$true] %s346
      %349 = dma.vmem_to_hbm [thread:$0]  %s347, 128, %s6, [#allocation4]
    $region45: #{tpu_custom_call.1} parent=1 // pred_fallthru
      _
    // Predicated region
    $region46: #{tpu_custom_call.1} parent=1 // pred_check
      _
    $region47: #{tpu_custom_call.1} parent=1 // pred_check_branch
      %351 = sbr.rel (0) target = $region49
    $region48: #{tpu_custom_call.1} parent=1 // pred_region
      %352 = dma.done [#allocation4], 128
    $region49: #{tpu_custom_call.1} parent=1 // pred_fallthru
      _
    %353 = vsyncpa [#allocation3], 1
    %354 = vsyncpa [#allocation6], 1
    %355 = vsyncpa [#allocation9], 1
    %356 = vsyncpa [#allocation4], 1

</llo_original>
